<compile_context>
chip_gen: v6e
topology: v6e:2x2x1
jax: 0.10.0
libtpu: 0.0.40
codegen_flags: <defaults>
</compile_context>

<pallas_src>
import functools

import jax
import jax.numpy as jnp
import numpy as np
from jax.experimental import pallas as pl
from jax.experimental.pallas import tpu as pltpu


# -----------------------------------------------------------------------------
# Shared kernel: tiled  y = x @ w + b   (used for the hoisted LSTM input
# projection and for the final vocab projection).
# -----------------------------------------------------------------------------
def linear_kernel(x_ref, w_ref, b_ref, o_ref):
    o_ref[...] = (jnp.dot(x_ref[...], w_ref[...],
                          preferred_element_type=jnp.float32)
                  + b_ref[...]).astype(o_ref.dtype)


def linear(x, w, b, *, tm=128, tn=256):
    M, K = x.shape
    _, N = w.shape
    tm = min(tm, M)
    tn = min(tn, N)
    assert M % tm == 0 and N % tn == 0
    return pl.pallas_call(
        linear_kernel,
        out_shape=jax.ShapeDtypeStruct((M, N), jnp.float32),
        grid_spec=pltpu.PrefetchScalarGridSpec(
            num_scalar_prefetch=0,
            grid=(M // tm, N // tn),
            in_specs=[
                pl.BlockSpec((tm, K), lambda i, j: (i, 0)),
                pl.BlockSpec((K, tn), lambda i, j: (0, j)),
                pl.BlockSpec((1, tn), lambda i, j: (0, j)),
            ],
            out_specs=pl.BlockSpec((tm, tn), lambda i, j: (i, j)),
        ),
        compiler_params=pltpu.CompilerParams(
            dimension_semantics=("parallel", "parallel")),
    )(x, w, b)


# -----------------------------------------------------------------------------
# Kernel 1: LSTM recurrence.  Input gates are precomputed (hoisted projection),
# so each step is a single (tb, D)@(D, 4D) recurrent matmul plus elementwise.
# Grid = (batch blocks [parallel], time chunks [arbitrary]); h/c live in VMEM
# scratch across the time chunks of each batch block.
# -----------------------------------------------------------------------------
def lstm_kernel(gin_ref, h0_ref, c0_ref, whh_ref, out_ref, h_scr, c_scr):
    D = h0_ref.shape[-1]
    Tc = gin_ref.shape[0]

    @pl.when(pl.program_id(1) == 0)
    def _():
        h_scr[...] = h0_ref[...]
        c_scr[...] = c0_ref[...]

    h = h_scr[...]                    # (tb, D)
    c = c_scr[...]                    # (tb, D)
    whh = whh_ref[...]                # (D, 4D), gate order i|f|g|o

    for j in range(Tc):               # static unroll over the time chunk
        gates = gin_ref[j] + jnp.dot(h, whh,
                                     preferred_element_type=jnp.float32)  # (tb, 4D)
        i = jax.nn.sigmoid(gates[:, 0 * D:1 * D])
        f = jax.nn.sigmoid(gates[:, 1 * D:2 * D])
        g = jnp.tanh(gates[:, 2 * D:3 * D])
        o = jax.nn.sigmoid(gates[:, 3 * D:4 * D])
        c = f * c + i * g
        h = o * jnp.tanh(c)
        # batch-major output so attention consumes it without a transpose
        out_ref[:, pl.ds(j, 1), :] = h[:, None, :]

    h_scr[...] = h
    c_scr[...] = c


def lstm_forward(gates_in, h0, c0, whh_f, *, tb=8, tc=8):
    # gates_in: (T, B, 4D) time-major (precomputed x@W_ih + b); output (B, T, D)
    T, B, G = gates_in.shape
    D = h0.shape[-1]
    assert G == 4 * D
    tb = min(tb, B)
    tc = min(tc, T)
    assert B % tb == 0 and T % tc == 0
    return pl.pallas_call(
        lstm_kernel,
        out_shape=jax.ShapeDtypeStruct((B, T, D), jnp.float32),
        grid_spec=pltpu.PrefetchScalarGridSpec(
            num_scalar_prefetch=0,
            grid=(B // tb, T // tc),
            in_specs=[
                pl.BlockSpec((tc, tb, G), lambda b, t: (t, b, 0)),   # gates_in
                pl.BlockSpec((tb, D), lambda b, t: (b, 0)),          # h0
                pl.BlockSpec((tb, D), lambda b, t: (b, 0)),          # c0
                pl.BlockSpec((D, G), lambda b, t: (0, 0)),           # W_hh^T fused
            ],
            out_specs=pl.BlockSpec((tb, tc, D), lambda b, t: (b, t, 0)),
            scratch_shapes=[pltpu.VMEM((tb, D), jnp.float32),
                            pltpu.VMEM((tb, D), jnp.float32)],
        ),
        compiler_params=pltpu.CompilerParams(
            dimension_semantics=("parallel", "arbitrary")),
    )(gates_in, h0, c0, whh_f)


# -----------------------------------------------------------------------------
# Kernel 2: Bahdanau attention + V projection for a block of tb batch elements.
# Everything is kept 2-D (flattened rows) so all projections are single large
# MXU matmuls; only the tanh/softmax/context core is per-batch-element.
# The V(cat(context, out)) concat is realized as context@V1 + out@V2.
# -----------------------------------------------------------------------------
def attn_kernel(tb, L, T, enc_ref, dec_ref, wh_ref, ws_ref, bs_ref, vt_ref,
                v1_ref, v2_ref, bv_ref, vout_ref):
    wh = jnp.dot(enc_ref[...], wh_ref[...],
                 preferred_element_type=jnp.float32)                 # (tb*L, D)
    ws = (jnp.dot(dec_ref[...], ws_ref[...],
                  preferred_element_type=jnp.float32) + bs_ref[...])  # (tb*T, D)
    vt = vt_ref[...]                                                  # (1, D)

    ctx = []
    for b in range(tb):                      # static unroll over batch block
        wh_b = wh[b * L:(b + 1) * L, :]      # (L, D)
        ws_b = ws[b * T:(b + 1) * T, :]      # (T, D)
        # e[t, k] = v . tanh(W_s dec_t + W_h enc_k)
        th = jnp.tanh(ws_b[:, None, :] + wh_b[None, :, :])            # (T, L, D)
        e = jnp.sum(th * vt, axis=-1)                                 # (T, L)
        a = jax.nn.softmax(e, axis=-1)       # softmax over encoder length
        ctx.append(jnp.dot(a, enc_ref[b * L:(b + 1) * L, :],
                           preferred_element_type=jnp.float32))       # (T, D)
    context = jnp.concatenate(ctx, axis=0)                            # (tb*T, D)

    vout_ref[...] = (jnp.dot(context, v1_ref[...],
                             preferred_element_type=jnp.float32)
                     + jnp.dot(dec_ref[...], v2_ref[...],
                               preferred_element_type=jnp.float32)
                     + bv_ref[...])                                   # (tb*T, D)


def attn_context(enc_flat, dec_flat, p, B, L, T, D, *, tb=8):
    tb = min(tb, B)
    assert B % tb == 0
    kernel = functools.partial(attn_kernel, tb, L, T)
    return pl.pallas_call(
        kernel,
        out_shape=jax.ShapeDtypeStruct((B * T, D), jnp.float32),
        grid_spec=pltpu.PrefetchScalarGridSpec(
            num_scalar_prefetch=0,
            grid=(B // tb,),
            in_specs=[
                pl.BlockSpec((tb * L, D), lambda b: (b, 0)),   # encoder rows
                pl.BlockSpec((tb * T, D), lambda b: (b, 0)),   # decoder rows
                pl.BlockSpec((D, D), lambda b: (0, 0)),        # W_h^T
                pl.BlockSpec((D, D), lambda b: (0, 0)),        # W_s^T
                pl.BlockSpec((1, D), lambda b: (0, 0)),        # b_s
                pl.BlockSpec((1, D), lambda b: (0, 0)),        # v_t
                pl.BlockSpec((D, D), lambda b: (0, 0)),        # V^T (context half)
                pl.BlockSpec((D, D), lambda b: (0, 0)),        # V^T (decoder half)
                pl.BlockSpec((1, D), lambda b: (0, 0)),        # b_V
            ],
            out_specs=pl.BlockSpec((tb * T, D), lambda b: (b, 0)),
        ),
        compiler_params=pltpu.CompilerParams(
            dimension_semantics=("parallel",)),
    )(enc_flat, dec_flat, p["wh_t"], p["ws_t"], p["bs"], p["vt"],
      p["v1_t"], p["v2_t"], p["bv"])


# -----------------------------------------------------------------------------
# Full forward (mirrors AttnOutputDecoder.forward)
# -----------------------------------------------------------------------------
def forward(params, words, encoder_output, pre_h, cell):
    B, T = words.shape
    _, L, D = encoder_output.shape
    V = params["vp_t"].shape[-1]

    # Embedding gather in time-major index order (no data transpose afterwards).
    emb_tm = params["emb"][words.T]                         # (T, B, D)

    # Hoisted LSTM input projection: one big MXU matmul over all timesteps.
    gates_in = linear(emb_tm.reshape(T * B, D), params["wih_f"], params["b_f"])
    gates_in = gates_in.reshape(T, B, 4 * D)                # time-major

    dec = lstm_forward(gates_in, pre_h, cell, params["whh_f"])   # (B, T, D)

    # Flattened 2-D views (free row-major reshapes, lane-dense rows).
    v = attn_context(encoder_output.reshape(B * L, D), dec.reshape(B * T, D),
                     params, B, L, T, D)                    # (B*T, D)

    # Vocab projection as a separate tiled, lane-dense MXU matmul.
    out = linear(v, params["vp_t"], params["bvp"])          # (B*T, V)
    return out.reshape(B, T, V)


# Pure-JAX reference (for correctness check only)
def forward_ref(p, words, encoder_output, pre_h, cell):
    D = pre_h.shape[-1]
    emb = p["emb"][words]                     # (B, T, D)
    x = jnp.transpose(emb, (1, 0, 2))         # (T, B, D)

    def step(carry, x_t):
        h, c = carry
        gates = x_t @ p["wih_f"] + h @ p["whh_f"] + p["b_f"]
        i = jax.nn.sigmoid(gates[:, 0 * D:1 * D])
        f = jax.nn.sigmoid(gates[:, 1 * D:2 * D])
        g = jnp.tanh(gates[:, 2 * D:3 * D])
        o = jax.nn.sigmoid(gates[:, 3 * D:4 * D])
        c = f * c + i * g
        h = o * jnp.tanh(c)
        return (h, c), h

    _, hs = jax.lax.scan(step, (pre_h, cell), x)
    dec = jnp.transpose(hs, (1, 0, 2))                       # (B, T, D)
    wh = encoder_output @ p["wh_t"]                          # (B, L, D)
    ws = dec @ p["ws_t"] + p["bs"]                           # (B, T, D)
    e = jnp.sum(jnp.tanh(wh[:, :, None, :] + ws[:, None, :, :]) * p["vt"],
                axis=-1)                                     # (B, L, T)
    a = jax.nn.softmax(e, axis=1)                            # softmax over L
    context = jnp.einsum("blt,bld->btd", a, encoder_output)
    v = context @ p["v1_t"] + dec @ p["v2_t"] + p["bv"]
    return v @ p["vp_t"] + p["bvp"]


def init_params(key, dim, dict_size):
    ks = jax.random.split(key, 13)
    s = 0.1
    return dict(
        emb=jax.random.normal(ks[0], (dict_size, dim), jnp.float32) * s,
        # LSTM weights fused along the gate axis, order i|f|g|o (PyTorch order)
        wih_f=jax.random.normal(ks[1], (dim, 4 * dim), jnp.float32) * s,
        whh_f=jax.random.normal(ks[2], (dim, 4 * dim), jnp.float32) * s,
        b_f=jax.random.normal(ks[3], (1, 4 * dim), jnp.float32) * s,  # b_ih + b_hh
        wh_t=jax.random.normal(ks[4], (dim, dim), jnp.float32) * s,   # W_h (no bias)
        ws_t=jax.random.normal(ks[5], (dim, dim), jnp.float32) * s,   # W_s
        bs=jax.random.normal(ks[6], (1, dim), jnp.float32) * s,
        vt=jax.random.normal(ks[7], (1, dim), jnp.float32) * s,       # v_t (no bias)
        v1_t=jax.random.normal(ks[8], (dim, dim), jnp.float32) * s,   # V[:, :dim]^T
        v2_t=jax.random.normal(ks[9], (dim, dim), jnp.float32) * s,   # V[:, dim:]^T
        bv=jax.random.normal(ks[10], (1, dim), jnp.float32) * s,
        vp_t=jax.random.normal(ks[11], (dim, dict_size), jnp.float32) * s,
        bvp=jax.random.normal(ks[12], (1, dict_size), jnp.float32) * s,
    )


if __name__ == "__main__":
    # lane/sublane aligned small shapes: batch, dec seq, enc len, dim, dict_size
    B, T, L, DIM, VOCAB = 16, 16, 16, 128, 256

    key = jax.random.PRNGKey(0)
    k_par, k_words, k_enc, k_h, k_c = jax.random.split(key, 5)
    params = init_params(k_par, DIM, VOCAB)

    words = jax.random.randint(k_words, (B, T), 0, VOCAB)              # token ids
    encoder_output = jax.random.normal(k_enc, (B, L, DIM), jnp.float32)
    pre_h = jax.random.normal(k_h, (B, DIM), jnp.float32)
    # forward() draws cell = torch.randn((1, B, dim)); drawn deterministically here
    cell = jax.random.normal(k_c, (B, DIM), jnp.float32)

    out = forward(params, words, encoder_output, pre_h, cell)
    out = jax.block_until_ready(out)

    ref = forward_ref(params, words, encoder_output, pre_h, cell)
    assert out.shape == (B, T, VOCAB)
    np.testing.assert_allclose(np.asarray(out), np.asarray(ref),
                               rtol=1e-2, atol=1e-2)

    # TODO(synk): `serial()` (autoregressive np.random.choice sampling loop) has
    # data-dependent termination and host-side sampling; only forward() is kernelized.
    print("KERNEL_OK")
</pallas_src>

<mosaic_0001>
module attributes {stable_mosaic.version = 11 : i64} {
  func.func @linear_kernel(%arg0: i32, %arg1: i32, %arg2: memref<128x128xf32, #tpu.memory_space<vmem>>, %arg3: memref<128x256xf32, #tpu.memory_space<vmem>>, %arg4: memref<1x256xf32, #tpu.memory_space<vmem>>, %arg5: memref<128x256xf32, #tpu.memory_space<vmem>>) attributes {dimension_semantics = [#tpu.dimension_semantics<parallel>, #tpu.dimension_semantics<parallel>], iteration_bounds = array<i64: 2, 2>, scalar_prefetch = 0 : i64, scratch_operands = 0 : i64, tpu.core_type = #tpu.core_type<tc>, window_params = [{transform_indices = @transform_0, window_bounds = array<i64: 128, 128>}, {transform_indices = @transform_1, window_bounds = array<i64: 128, 256>}, {transform_indices = @transform_2, window_bounds = array<i64: 1, 256>}, {transform_indices = @transform_3, window_bounds = array<i64: 128, 256>}]} {
    %c0 = arith.constant 0 : index
    %c0_0 = arith.constant 0 : index
    %0 = vector.load %arg2[%c0, %c0_0] : memref<128x128xf32, #tpu.memory_space<vmem>>, vector<128x128xf32>
    %c0_1 = arith.constant 0 : index
    %c0_2 = arith.constant 0 : index
    %1 = vector.load %arg3[%c0_1, %c0_2] : memref<128x256xf32, #tpu.memory_space<vmem>>, vector<128x256xf32>
    %cst = arith.constant dense<0.000000e+00> : vector<128x256xf32>
    %2 = tpu.matmul %0, %1, %cst {dimension_numbers = #tpu.dot_dimension_numbers<[1], [0], [0], [1], [0, 0, 1, 1], [], []>} : vector<128x128xf32>, vector<128x256xf32>, vector<128x256xf32> -> vector<128x256xf32>
    %c0_3 = arith.constant 0 : index
    %c0_4 = arith.constant 0 : index
    %3 = vector.load %arg4[%c0_3, %c0_4] : memref<1x256xf32, #tpu.memory_space<vmem>>, vector<1x256xf32>
    %4 = vector.broadcast %3 : vector<1x256xf32> to vector<128x256xf32>
    %5 = arith.addf %2, %4 : vector<128x256xf32>
    %c0_5 = arith.constant 0 : index
    %c0_6 = arith.constant 0 : index
    %6 = vector.load %arg5[%c0_5, %c0_6] : memref<128x256xf32, #tpu.memory_space<vmem>>, vector<128x256xf32>
    tpu.vector_store %arg5[%c0_5, %c0_6], %5 {strides = array<i32>} : memref<128x256xf32, #tpu.memory_space<vmem>>, vector<128x256xf32>,
    return
  }
  func.func @transform_0(%arg0: i32, %arg1: i32) -> (i32, i32) {
    %c0_i32 = arith.constant 0 : i32
    %c0_i32_0 = arith.constant 0 : i32
    return %arg0, %c0_i32 : i32, i32
  }
  func.func @transform_1(%arg0: i32, %arg1: i32) -> (i32, i32) {
    %c0_i32 = arith.constant 0 : i32
    %c0_i32_0 = arith.constant 0 : i32
    return %c0_i32, %arg1 : i32, i32
  }
  func.func @transform_2(%arg0: i32, %arg1: i32) -> (i32, i32) {
    %c0_i32 = arith.constant 0 : i32
    %c0_i32_0 = arith.constant 0 : i32
    return %c0_i32, %arg1 : i32, i32
  }
  func.func @transform_3(%arg0: i32, %arg1: i32) -> (i32, i32) {
    %c0_i32 = arith.constant 0 : i32
    return %arg0, %arg1 : i32, i32
  }
}

</mosaic_0001>

<llo_original>
// kernel: tpu_custom_call.1
$region0: #{tpu_custom_call.1}
  #allocation0 [shape = 'u32[]', space=smem, size = 0x4, offset = 0x4, fixed_abs, tag = 'smem constant byte address 0x4 - core index']
  #allocation1 [shape = 'u32[144,128]{1,0:T(1,128)}', space=vmem, size = 0x12000, scoped, tag = 'internal scratch']
  %s0 = inlined_call_operand.hbm [shape: f32[256,128], index: 0, kind: input, shape index: {}]
  %s1 = inlined_call_operand.hbm [shape: f32[128,512], index: 1, kind: input, shape index: {}]
  %s2 = inlined_call_operand.hbm [shape: f32[1,512], index: 2, kind: input, shape index: {}]
  %s3 = inlined_call_operand.hbm [shape: f32[256,512], index: 3, kind: output, shape index: {}]
  %s4 = sld [smem:[#allocation0]]
  $region57: #{tpu_custom_call.1} parent=0
    _
  %s6 = ssub.s32 1, %s4
  %s7 = scalar_select 0, %s6, %s4
  $region1: #{tpu_custom_call.1} parent=0
    #allocation2 [shape = 'u8[131072]{0}', space=vmem, size = 0x20000, scoped, tag = 'input window, operand 0']
    #allocation3 [shape = 's32[2]{0}', space=sflag, size = 0x8, scoped, tag = 'scoped memory for tpu_custom_call.1']
    #allocation4 [shape = 's32[2]{0}', space=sflag, size = 0x8, scoped, tag = 'scoped memory for tpu_custom_call.1']
    #allocation5 [shape = 'u8[262144]{0}', space=vmem, size = 0x40000, scoped, tag = 'input window, operand 1']
    #allocation6 [shape = 's32[2]{0}', space=sflag, size = 0x8, scoped, tag = 'scoped memory for tpu_custom_call.1']
    #allocation7 [shape = 'u8[2048]{0}', space=vmem, size = 0x800, scoped, tag = 'input window, operand 2']
    #allocation8 [shape = 'u8[262144]{0}', space=vmem, size = 0x40000, scoped, tag = 'output window, operand 0']
    %8 = vsyncpa [#allocation3], 0
    %s9 = scalar_lea.sflag [#allocation3], 1
    %10 = vsyncpa %s9, 0
    %11 = vsyncpa [#allocation6], 0
    %s12 = scalar_lea.sflag [#allocation6], 1
    %13 = vsyncpa %s12, 0
    %14 = vsyncpa [#allocation4], 0
    %s15 = scalar_lea.sflag [#allocation4], 1
    %16 = vsyncpa %s15, 0
    loop: start=0, step=1, limit=6
    $region2: #{tpu_custom_call.1} parent=1 // loop_pre_header
      _
    $region3: #{tpu_custom_call.1} parent=1 // loop_header
      %s18 = sphi 0, %s22
      %p19 = scmp.ge.s32.totalorder %s18, 6
      %s25 = sphi 0, %s37
      %s26 = sphi 0, %s33
      %s27 = sphi 0, %s25
      %s28 = sphi 0, %s26
      %s29 = sphi 0, %s27
      %s30 = sphi 0, %s28
      %s40 = sphi 0, %s42
      %s43 = sphi 0, %s40
      %s44 = sphi 0, %s43
      %s60 = sphi 0, %s44
      %s66 = sphi 0, %s68
      %s69 = sphi 0, %s66
      %s70 = sphi 0, %s69
      %s86 = sphi 0, %s70
      %s92 = sphi 0, %s94
      %s95 = sphi 0, %s92
      %s96 = sphi 0, %s95
      %s112 = sphi 0, %s96
      %s120 = sphi 0, %s122
      %s123 = sphi 0, %s120
      %s124 = sphi 0, %s123
      %s140 = sphi 0, %s124
    $region4: #{tpu_custom_call.1} parent=1 // loop_header_branch
      %21 = sbr.rel (%p19) target = $region8
    $region5: #{tpu_custom_call.1} parent=1 // loop_body
      %s23 = ssub.s32 %s18, 1
      %s24 = ssub.s32 %s18, 2
      %s31 = sadd.s32 1, %s26
      %p32 = scmp.ge.s32.totalorder %s31, 2
      %s33 = scalar_select %p32, 0, %s31
      %s34 = sadd.s32 1, %s25
      %s35 = scalar_select %p32, %s34, %s25
      %p36 = scmp.ge.s32.totalorder %s35, 2
      %s37 = scalar_select %p36, 0, %s35
      %s38 = ssub.s32 %s25, %s37
      %p39 = scmp.eq.s32.totalorder %s38, 0
      %s41 = sadd.s32 %s40, 1
      %s42 = scalar_select %p39, %s40, %s41
      %p45 = pneg %p39
      %p46 = scmp.eq.s32.totalorder %s18, 3
      %p47 = por %p45, %p46
      %p48 = scmp.ne.s32.totalorder %s40, %s43
      %p49 = scmp.eq.s32.totalorder %s18, 0
      %p50 = por %p48, %p49
      %p51 = scmp.ne.s32.totalorder %s40, %s43
      %p52 = scmp.eq.s32.totalorder %s23, 3
      %p53 = por %p51, %p52
      %p54 = scmp.ne.s32.totalorder %s43, %s44
      %p55 = scmp.eq.s32.totalorder %s23, 0
      %p56 = por %p54, %p55
      %p57 = scmp.ne.s32.totalorder %s43, %s44
      %p58 = scmp.eq.s32.totalorder %s24, 3
      %p59 = por %p57, %p58
      %p61 = scmp.ne.s32.totalorder %s44, %s60
      %p62 = scmp.eq.s32.totalorder %s24, 0
      %p63 = por %p61, %p62
      %s64 = ssub.s32 %s26, %s33
      %p65 = scmp.eq.s32.totalorder %s64, 0
      %s67 = sadd.s32 %s66, 1
      %s68 = scalar_select %p65, %s66, %s67
      %p71 = pneg %p65
      %p72 = scmp.eq.s32.totalorder %s18, 3
      %p73 = por %p71, %p72
      %p74 = scmp.ne.s32.totalorder %s66, %s69
      %p75 = scmp.eq.s32.totalorder %s18, 0
      %p76 = por %p74, %p75
      %p77 = scmp.ne.s32.totalorder %s66, %s69
      %p78 = scmp.eq.s32.totalorder %s23, 3
      %p79 = por %p77, %p78
      %p80 = scmp.ne.s32.totalorder %s69, %s70
      %p81 = scmp.eq.s32.totalorder %s23, 0
      %p82 = por %p80, %p81
      %p83 = scmp.ne.s32.totalorder %s69, %s70
      %p84 = scmp.eq.s32.totalorder %s24, 3
      %p85 = por %p83, %p84
      %p87 = scmp.ne.s32.totalorder %s70, %s86
      %p88 = scmp.eq.s32.totalorder %s24, 0
      %p89 = por %p87, %p88
      %s90 = ssub.s32 %s26, %s33
      %p91 = scmp.eq.s32.totalorder %s90, 0
      %s93 = sadd.s32 %s92, 1
      %s94 = scalar_select %p91, %s92, %s93
      %p97 = pneg %p91
      %p98 = scmp.eq.s32.totalorder %s18, 3
      %p99 = por %p97, %p98
      %p100 = scmp.ne.s32.totalorder %s92, %s95
      %p101 = scmp.eq.s32.totalorder %s18, 0
      %p102 = por %p100, %p101
      %p103 = scmp.ne.s32.totalorder %s92, %s95
      %p104 = scmp.eq.s32.totalorder %s23, 3
      %p105 = por %p103, %p104
      %p106 = scmp.ne.s32.totalorder %s95, %s96
      %p107 = scmp.eq.s32.totalorder %s23, 0
      %p108 = por %p106, %p107
      %p109 = scmp.ne.s32.totalorder %s95, %s96
      %p110 = scmp.eq.s32.totalorder %s24, 3
      %p111 = por %p109, %p110
      %p113 = scmp.ne.s32.totalorder %s96, %s112
      %p114 = scmp.eq.s32.totalorder %s24, 0
      %p115 = por %p113, %p114
      %s116 = ssub.s32 %s25, %s37
      %s117 = ssub.s32 %s26, %s33
      %s118 = sor.u32 %s116, %s117
      %p119 = scmp.eq.s32.totalorder %s118, 0
      %s121 = sadd.s32 %s120, 1
      %s122 = scalar_select %p119, %s120, %s121
      %p125 = pneg %p119
      %p126 = scmp.eq.s32.totalorder %s18, 3
      %p127 = por %p125, %p126
      %p128 = scmp.ne.s32.totalorder %s120, %s123
      %p129 = scmp.eq.s32.totalorder %s18, 0
      %p130 = por %p128, %p129
      %p131 = scmp.ne.s32.totalorder %s120, %s123
      %p132 = scmp.eq.s32.totalorder %s23, 3
      %p133 = por %p131, %p132
      %p134 = scmp.ne.s32.totalorder %s123, %s124
      %p135 = scmp.eq.s32.totalorder %s23, 0
      %p136 = por %p134, %p135
      %p137 = scmp.ne.s32.totalorder %s123, %s124
      %p138 = scmp.eq.s32.totalorder %s24, 3
      %p139 = por %p137, %p138
      %p141 = scmp.ne.s32.totalorder %s124, %s140
      %p142 = scmp.eq.s32.totalorder %s24, 0
      %p143 = por %p141, %p142
      %p144 = scmp.le.s32.totalorder 1, %s18
      %p145 = scmp.lt.s32.totalorder %s18, 5
      %p146 = pnand %p144, %p145
      %p147 = pneg %p146
      // Predicated region
      $region9: #{tpu_custom_call.1} parent=5 // pred_check
        _
      $region10: #{tpu_custom_call.1} parent=5 // pred_check_branch
        %149 = sbr.rel (%p146) target = $region12
      $region11: #{tpu_custom_call.1} parent=5 // pred_region
        %s150 = ssub.s32 %s18, 1
      $region12: #{tpu_custom_call.1} parent=5 // pred_fallthru
        _
      %p151 = scmp.lt.s32.totalorder %s18, 4
      // Predicated region
      $region13: #{tpu_custom_call.1} parent=5 // pred_check
        %p152 = pneg %p151
      $region14: #{tpu_custom_call.1} parent=5 // pred_check_branch
        %154 = sbr.rel (%p152) target = $region16
      $region15: #{tpu_custom_call.1} parent=5 // pred_region
        // Predicated region
        $region17: #{tpu_custom_call.1} parent=15 // pred_check
          %p155 = pneg %p50
        $region18: #{tpu_custom_call.1} parent=15 // pred_check_branch
          %157 = sbr.rel (%p155) target = $region20
        $region19: #{tpu_custom_call.1} parent=15 // pred_region
          %s158 = sand.u32 %s40, 1
          %s159 = scalar_lea.sflag [#allocation3], %s158
          %s160 = sand.u32 %s40, 1
          %s161 = smul.addr %s160, 128
          %s162 = scalar_lea.vmem [#allocation2], %s161
          %s163 = smul.u32 16, %s25
          %s165 = ssub.s32 2048, 2048
          %166 = vsyncadd %s159, %s165
          %s167 = smul.addr %s163, 128
          %s168 = scalar_lea.hbm %s0, %s167
          %s169 = sshll.u32 %s162, 4
          %s170 = int_to_ptr.vmem [resolvable:$true] %s169
          %175 = dma.hbm_to_vmem [thread:$0]  %s168, 2048, %s170, %s159, 128, 128, 8
        $region20: #{tpu_custom_call.1} parent=15 // pred_fallthru
          _
        // Predicated region
        $region21: #{tpu_custom_call.1} parent=15 // pred_check
          %p176 = pneg %p76
        $region22: #{tpu_custom_call.1} parent=15 // pred_check_branch
          %178 = sbr.rel (%p176) target = $region24
        $region23: #{tpu_custom_call.1} parent=15 // pred_region
          %s179 = sand.u32 %s18, 1
          %s180 = scalar_lea.sflag [#allocation6], %s179
          %s181 = sand.u32 %s66, 1
          %s182 = smul.addr %s181, 256
          %s183 = scalar_lea.vmem [#allocation5], %s182
          %s184 = smul.u32 2, %s26
          %s186 = ssub.s32 4096, 4096
          %187 = vsyncadd %s180, %s186
          %s188 = smul.addr %s184, 128
          %s189 = scalar_lea.hbm %s1, %s188
          %s190 = sshll.u32 %s183, 4
          %s191 = int_to_ptr.vmem [resolvable:$true] %s190
          %196 = dma.hbm_to_vmem [thread:$0]  %s189, 4096, %s191, %s180, 512, 256, 16
        $region24: #{tpu_custom_call.1} parent=15 // pred_fallthru
          _
        // Predicated region
        $region25: #{tpu_custom_call.1} parent=15 // pred_check
          %p197 = pneg %p102
        $region26: #{tpu_custom_call.1} parent=15 // pred_check_branch
          %199 = sbr.rel (%p197) target = $region28
        $region27: #{tpu_custom_call.1} parent=15 // pred_region
          %s200 = sand.u32 %s18, 1
          %s201 = scalar_lea.sflag [#allocation6], %s200
          %s202 = sand.u32 %s92, 1
          %s203 = smul.addr %s202, 2
          %s204 = scalar_lea.vmem [#allocation7], %s203
          %s205 = smul.u32 2, %s26
          %s207 = ssub.s32 32, 32
          %208 = vsyncadd %s201, %s207
          %s209 = smul.addr %s205, 16
          %s210 = scalar_lea.hbm %s2, %s209
          %s212 = sshll.u32 %s204, 4
          %s213 = int_to_ptr.vmem [resolvable:$true] %s212
          %215 = dma.hbm_to_vmem [thread:$0]  %s210, 32, %s213, %s201
        $region28: #{tpu_custom_call.1} parent=15 // pred_fallthru
          _
      $region16: #{tpu_custom_call.1} parent=5 // pred_fallthru
        _
      %p216 = scmp.le.s32.totalorder 1, %s18
      %p217 = scmp.lt.s32.totalorder %s18, 5
      %p218 = pnand %p216, %p217
      %p219 = pneg %p218
      // Predicated region
      $region29: #{tpu_custom_call.1} parent=5 // pred_check
        _
      $region30: #{tpu_custom_call.1} parent=5 // pred_check_branch
        %221 = sbr.rel (%p218) target = $region32
      $region31: #{tpu_custom_call.1} parent=5 // pred_region
        %s222 = ssub.s32 %s18, 1
        %s223 = sand.u32 %s43, 1
        %s224 = scalar_lea.sflag [#allocation3], %s223
        %s225 = sand.u32 %s43, 1
        %s226 = smul.addr %s225, 128
        %s227 = scalar_lea.vmem [#allocation2], %s226
        // Predicated region
        $region33: #{tpu_custom_call.1} parent=31 // pred_check
          %p228 = pneg %p56
        $region34: #{tpu_custom_call.1} parent=31 // pred_check_branch
          %230 = sbr.rel (%p228) target = $region36
        $region35: #{tpu_custom_call.1} parent=31 // pred_region
          %231 = dma.done %s224, 2048
        $region36: #{tpu_custom_call.1} parent=31 // pred_fallthru
          _
        %s232 = sand.u32 %s23, 1
        %s233 = scalar_lea.sflag [#allocation6], %s232
        %s234 = sand.u32 %s69, 1
        %s235 = smul.addr %s234, 256
        %s236 = scalar_lea.vmem [#allocation5], %s235
        // Predicated region
        $region37: #{tpu_custom_call.1} parent=31 // pred_check
          %p237 = pneg %p82
        $region38: #{tpu_custom_call.1} parent=31 // pred_check_branch
          %239 = sbr.rel (%p237) target = $region40
        $region39: #{tpu_custom_call.1} parent=31 // pred_region
          %240 = dma.done %s233, 4096
        $region40: #{tpu_custom_call.1} parent=31 // pred_fallthru
          _
        %s241 = sand.u32 %s23, 1
        %s242 = scalar_lea.sflag [#allocation6], %s241
        %s243 = sand.u32 %s95, 1
        %s244 = smul.addr %s243, 2
        %s245 = scalar_lea.vmem [#allocation7], %s244
        // Predicated region
        $region41: #{tpu_custom_call.1} parent=31 // pred_check
          %p246 = pneg %p108
        $region42: #{tpu_custom_call.1} parent=31 // pred_check_branch
          %248 = sbr.rel (%p246) target = $region44
        $region43: #{tpu_custom_call.1} parent=31 // pred_region
          %249 = dma.done %s242, 32
        $region44: #{tpu_custom_call.1} parent=31 // pred_fallthru
          _
        %s250 = sand.u32 %s43, 1
        %s251 = scalar_lea.sflag [#allocation3], %s250
        %s252 = sand.u32 %s43, 1
        %s253 = smul.addr %s252, 128
        %s254 = scalar_lea.vmem [#allocation2], %s253
        %p255 = pneg %p56
        %p256 = pneg %p53
        %s257 = sand.u32 %s23, 1
        %s258 = scalar_lea.sflag [#allocation6], %s257
        %s259 = sand.u32 %s69, 1
        %s260 = smul.addr %s259, 256
        %s261 = scalar_lea.vmem [#allocation5], %s260
        %p262 = pneg %p82
        %p263 = pneg %p79
        %s264 = sand.u32 %s23, 1
        %s265 = scalar_lea.sflag [#allocation6], %s264
        %s266 = sand.u32 %s95, 1
        %s267 = smul.addr %s266, 2
        %s268 = scalar_lea.vmem [#allocation7], %s267
        %p269 = pneg %p108
        %p270 = pneg %p105
        %p271 = pneg %p136
        %p272 = pneg %p133
        %s273 = sand.u32 %s123, 1
        %s274 = scalar_lea.sflag [#allocation4], %s273
        %s275 = sand.u32 %s123, 1
        %s276 = smul.addr %s275, 256
        %s277 = scalar_lea.vmem [#allocation8], %s276
        %s278 = smul.u32 16, %s27
        %s279 = smul.u32 2, %s28
        %s280 = smul.u32 2, %s28
        %s281 = smul.u32 16, %s27
        %s282 = smul.u32 2, %s28
        %v283 = vld [vmem:[%s227] sm:$0xff]
        %v284 = vld [vmem:[%s227 + $0x8] sm:$0xff]
        %v285 = vld [vmem:[%s227 + $0x10] sm:$0xff]
        %v286 = vld [vmem:[%s227 + $0x18] sm:$0xff]
        %v287 = vld [vmem:[%s227 + $0x20] sm:$0xff]
        %v288 = vld [vmem:[%s227 + $0x28] sm:$0xff]
        %v289 = vld [vmem:[%s227 + $0x30] sm:$0xff]
        %v290 = vld [vmem:[%s227 + $0x38] sm:$0xff]
        %v291 = vld [vmem:[%s227 + $0x40] sm:$0xff]
        %v292 = vld [vmem:[%s227 + $0x48] sm:$0xff]
        %v293 = vld [vmem:[%s227 + $0x50] sm:$0xff]
        %v294 = vld [vmem:[%s227 + $0x58] sm:$0xff]
        %v295 = vld [vmem:[%s227 + $0x60] sm:$0xff]
        %v296 = vld [vmem:[%s227 + $0x68] sm:$0xff]
        %v297 = vld [vmem:[%s227 + $0x70] sm:$0xff]
        %v298 = vld [vmem:[%s227 + $0x78] sm:$0xff]
        %v299 = vld [vmem:[%s236] sm:$0xff]
        %v300 = vld [vmem:[%s236 + $0x8] sm:$0xff]
        %v301 = vld [vmem:[%s236 + $0x10] sm:$0xff]
        %v302 = vld [vmem:[%s236 + $0x18] sm:$0xff]
        %v303 = vld [vmem:[%s236 + $0x20] sm:$0xff]
        %v304 = vld [vmem:[%s236 + $0x28] sm:$0xff]
        %v305 = vld [vmem:[%s236 + $0x30] sm:$0xff]
        %v306 = vld [vmem:[%s236 + $0x38] sm:$0xff]
        %v307 = vld [vmem:[%s236 + $0x40] sm:$0xff]
        %v308 = vld [vmem:[%s236 + $0x48] sm:$0xff]
        %v309 = vld [vmem:[%s236 + $0x50] sm:$0xff]
        %v310 = vld [vmem:[%s236 + $0x58] sm:$0xff]
        %v311 = vld [vmem:[%s236 + $0x60] sm:$0xff]
        %v312 = vld [vmem:[%s236 + $0x68] sm:$0xff]
        %v313 = vld [vmem:[%s236 + $0x70] sm:$0xff]
        %v314 = vld [vmem:[%s236 + $0x78] sm:$0xff]
        %v315 = vld [vmem:[%s236 + $0x80] sm:$0xff]
        %v316 = vld [vmem:[%s236 + $0x88] sm:$0xff]
        %v317 = vld [vmem:[%s236 + $0x90] sm:$0xff]
        %v318 = vld [vmem:[%s236 + $0x98] sm:$0xff]
        %v319 = vld [vmem:[%s236 + $0xa0] sm:$0xff]
        %v320 = vld [vmem:[%s236 + $0xa8] sm:$0xff]
        %v321 = vld [vmem:[%s236 + $0xb0] sm:$0xff]
        %v322 = vld [vmem:[%s236 + $0xb8] sm:$0xff]
        %v323 = vld [vmem:[%s236 + $0xc0] sm:$0xff]
        %v324 = vld [vmem:[%s236 + $0xc8] sm:$0xff]
        %v325 = vld [vmem:[%s236 + $0xd0] sm:$0xff]
        %v326 = vld [vmem:[%s236 + $0xd8] sm:$0xff]
        %v327 = vld [vmem:[%s236 + $0xe0] sm:$0xff]
        %v328 = vld [vmem:[%s236 + $0xe8] sm:$0xff]
        %v329 = vld [vmem:[%s236 + $0xf0] sm:$0xff]
        %v330 = vld [vmem:[%s236 + $0xf8] sm:$0xff]
        %v331 = vld [vmem:[%s245] sm:$0x3]
        %v333 = vlaneseq
        %v334 = vshrl.u32 %v333, 7
        %v335 = vsub.s32 0, %v334
        %v336 = vrot.slane %v331, %v335
        %v337 = vlaneseq
        %v338 = vshrl.u32 %v337, 7
        %v339 = vsub.s32 1, %v338
        %v340 = vrot.slane %v331, %v339
        %343 = vmatprep.subr.mxu0 %v330
        %344 = vmatpush1.msra.mxu0 %v329
        %345 = vmatprep.subr.mxu0 %v328
        %346 = vmatpush1.msra.mxu0 %v327
        %347 = vmatprep.subr.mxu0 %v326
        %348 = vmatpush1.msra.mxu0 %v325
        %349 = vmatprep.subr.mxu0 %v324
        %350 = vmatpush1.msra.mxu0 %v323
        %351 = vmatprep.subr.mxu0 %v322
        %352 = vmatpush1.msra.mxu0 %v321
        %353 = vmatprep.subr.mxu0 %v320
        %354 = vmatpush1.msra.mxu0 %v319
        %355 = vmatprep.subr.mxu0 %v318
        %356 = vmatpush1.msra.mxu0 %v317
        %357 = vmatprep.subr.mxu0 %v316
        %358 = vmatpush1.msra.mxu0 %v315
        %359 = vmatprep.subr.mxu0 %v314
        %360 = vmatpush1.msra.mxu0 %v313
        %361 = vmatprep.subr.mxu0 %v312
        %362 = vmatpush1.msra.mxu0 %v311
        %363 = vmatprep.subr.mxu0 %v310
        %364 = vmatpush1.msra.mxu0 %v309
        %365 = vmatprep.subr.mxu0 %v308
        %366 = vmatpush1.msra.mxu0 %v307
        %367 = vmatprep.subr.mxu0 %v306
        %368 = vmatpush1.msra.mxu0 %v305
        %369 = vmatprep.subr.mxu0 %v304
        %370 = vmatpush1.msra.mxu0 %v303
        %371 = vmatprep.subr.mxu0 %v302
        %372 = vmatpush1.msra.mxu0 %v301
        %373 = vmatprep.subr.mxu0 %v300
        %374 = vmatpush1.msra.mxu0 %v299
        %375 = vmatprep.subr.mxu0 0.0
        %376 = vmatpush2.msra.mxu0 0.0
        %377 = vmatprep.subr.mxu0 0.0
        %378 = vmatpush2.msra.mxu0 0.0
        %379 = vmatprep.subr.mxu0 0.0
        %380 = vmatpush2.msra.mxu0 0.0
        %381 = vmatprep.subr.mxu0 0.0
        %382 = vmatpush2.msra.mxu0 0.0
        %383 = vmatprep.subr.mxu0 0.0
        %384 = vmatpush2.msra.mxu0 0.0
        %385 = vmatprep.subr.mxu0 0.0
        %386 = vmatpush2.msra.mxu0 0.0
        %387 = vmatprep.subr.mxu0 0.0
        %388 = vmatpush2.msra.mxu0 0.0
        %389 = vmatprep.subr.mxu0 0.0
        %390 = vmatpush2.msra.mxu0 0.0
        %391 = vmatprep.subr.mxu0 0.0
        %392 = vmatpush2.msra.mxu0 0.0
        %393 = vmatprep.subr.mxu0 0.0
        %394 = vmatpush2.msra.mxu0 0.0
        %395 = vmatprep.subr.mxu0 0.0
        %396 = vmatpush2.msra.mxu0 0.0
        %397 = vmatprep.subr.mxu0 0.0
        %398 = vmatpush2.msra.mxu0 0.0
        %399 = vmatprep.subr.mxu0 0.0
        %400 = vmatpush2.msra.mxu0 0.0
        %401 = vmatprep.subr.mxu0 0.0
        %402 = vmatpush2.msra.mxu0 0.0
        %403 = vmatprep.subr.mxu0 0.0
        %404 = vmatpush2.msra.mxu0 0.0
        %405 = vmatprep.subr.mxu0 0.0
        %406 = vmatpush2.msra.mxu0 0.0
        %407 = vmatprep.mubr.f32.mxu0 0.0
        %408 = vmatmul.mubr.f32.gmra.mxu0 %v283
        %v409 = vpop.f32.mrf.mxu0
        %v410 = vadd.f32 %v336, %v409
        %v411 = vpop.f32.mrf.mxu0
        %v412 = vadd.f32 %v340, %v411
        %413 = vmatprep.mubr.f32.mxu0 0.0
        %414 = vmatmul.mubr.f32.gmra.mxu0 %v284
        %v415 = vpop.f32.mrf.mxu0
        %v416 = vadd.f32 %v336, %v415
        %v417 = vpop.f32.mrf.mxu0
        %v418 = vadd.f32 %v340, %v417
        %419 = vmatprep.mubr.f32.mxu0 0.0
        %420 = vmatmul.mubr.f32.gmra.mxu0 %v285
        %v421 = vpop.f32.mrf.mxu0
        %v422 = vadd.f32 %v336, %v421
        %v423 = vpop.f32.mrf.mxu0
        %v424 = vadd.f32 %v340, %v423
        %425 = vmatprep.mubr.f32.mxu0 0.0
        %426 = vmatmul.mubr.f32.gmra.mxu0 %v286
        %v427 = vpop.f32.mrf.mxu0
        %v428 = vadd.f32 %v336, %v427
        %v429 = vpop.f32.mrf.mxu0
        %v430 = vadd.f32 %v340, %v429
        %431 = vmatprep.mubr.f32.mxu0 0.0
        %432 = vmatmul.mubr.f32.gmra.mxu0 %v287
        %v433 = vpop.f32.mrf.mxu0
        %v434 = vadd.f32 %v336, %v433
        %v435 = vpop.f32.mrf.mxu0
        %v436 = vadd.f32 %v340, %v435
        %437 = vmatprep.mubr.f32.mxu0 0.0
        %438 = vmatmul.mubr.f32.gmra.mxu0 %v288
        %v439 = vpop.f32.mrf.mxu0
        %v440 = vadd.f32 %v336, %v439
        %v441 = vpop.f32.mrf.mxu0
        %v442 = vadd.f32 %v340, %v441
        %443 = vmatprep.mubr.f32.mxu0 0.0
        %444 = vmatmul.mubr.f32.gmra.mxu0 %v289
        %v445 = vpop.f32.mrf.mxu0
        %v446 = vadd.f32 %v336, %v445
        %v447 = vpop.f32.mrf.mxu0
        %v448 = vadd.f32 %v340, %v447
        %449 = vmatprep.mubr.f32.mxu0 0.0
        %450 = vmatmul.mubr.f32.gmra.mxu0 %v290
        %v451 = vpop.f32.mrf.mxu0
        %v452 = vadd.f32 %v336, %v451
        %v453 = vpop.f32.mrf.mxu0
        %v454 = vadd.f32 %v340, %v453
        %455 = vmatprep.mubr.f32.mxu0 0.0
        %456 = vmatmul.mubr.f32.gmra.mxu0 %v291
        %v457 = vpop.f32.mrf.mxu0
        %v458 = vadd.f32 %v336, %v457
        %v459 = vpop.f32.mrf.mxu0
        %v460 = vadd.f32 %v340, %v459
        %461 = vmatprep.mubr.f32.mxu0 0.0
        %462 = vmatmul.mubr.f32.gmra.mxu0 %v292
        %v463 = vpop.f32.mrf.mxu0
        %v464 = vadd.f32 %v336, %v463
        %v465 = vpop.f32.mrf.mxu0
        %v466 = vadd.f32 %v340, %v465
        %467 = vmatprep.mubr.f32.mxu0 0.0
        %468 = vmatmul.mubr.f32.gmra.mxu0 %v293
        %v469 = vpop.f32.mrf.mxu0
        %v470 = vadd.f32 %v336, %v469
        %v471 = vpop.f32.mrf.mxu0
        %v472 = vadd.f32 %v340, %v471
        %473 = vmatprep.mubr.f32.mxu0 0.0
        %474 = vmatmul.mubr.f32.gmra.mxu0 %v294
        %v475 = vpop.f32.mrf.mxu0
        %v476 = vadd.f32 %v336, %v475
        %v477 = vpop.f32.mrf.mxu0
        %v478 = vadd.f32 %v340, %v477
        %479 = vmatprep.mubr.f32.mxu0 0.0
        %480 = vmatmul.mubr.f32.gmra.mxu0 %v295
        %v481 = vpop.f32.mrf.mxu0
        %v482 = vadd.f32 %v336, %v481
        %v483 = vpop.f32.mrf.mxu0
        %v484 = vadd.f32 %v340, %v483
        %485 = vmatprep.mubr.f32.mxu0 0.0
        %486 = vmatmul.mubr.f32.gmra.mxu0 %v296
        %v487 = vpop.f32.mrf.mxu0
        %v488 = vadd.f32 %v336, %v487
        %v489 = vpop.f32.mrf.mxu0
        %v490 = vadd.f32 %v340, %v489
        %491 = vmatprep.mubr.f32.mxu0 0.0
        %492 = vmatmul.mubr.f32.gmra.mxu0 %v297
        %v493 = vpop.f32.mrf.mxu0
        %v494 = vadd.f32 %v336, %v493
        %v495 = vpop.f32.mrf.mxu0
        %v496 = vadd.f32 %v340, %v495
        %497 = vmatprep.mubr.f32.mxu0 0.0
        %498 = vmatmul.mubr.f32.gmra.mxu0 %v298
        %v499 = vpop.f32.mrf.mxu0
        %v500 = vadd.f32 %v336, %v499
        %v501 = vpop.f32.mrf.mxu0
        %v502 = vadd.f32 %v340, %v501
        %503 = vdwg.mxu0
        %504 = vst [vmem:[%s277] sm:$0xff] %v410
        %505 = vst [vmem:[%s277 + $0x8] sm:$0xff] %v412
        %506 = vst [vmem:[%s277 + $0x10] sm:$0xff] %v416
        %507 = vst [vmem:[%s277 + $0x18] sm:$0xff] %v418
        %508 = vst [vmem:[%s277 + $0x20] sm:$0xff] %v422
        %509 = vst [vmem:[%s277 + $0x28] sm:$0xff] %v424
        %510 = vst [vmem:[%s277 + $0x30] sm:$0xff] %v428
        %511 = vst [vmem:[%s277 + $0x38] sm:$0xff] %v430
        %512 = vst [vmem:[%s277 + $0x40] sm:$0xff] %v434
        %513 = vst [vmem:[%s277 + $0x48] sm:$0xff] %v436
        %514 = vst [vmem:[%s277 + $0x50] sm:$0xff] %v440
        %515 = vst [vmem:[%s277 + $0x58] sm:$0xff] %v442
        %516 = vst [vmem:[%s277 + $0x60] sm:$0xff] %v446
        %517 = vst [vmem:[%s277 + $0x68] sm:$0xff] %v448
        %518 = vst [vmem:[%s277 + $0x70] sm:$0xff] %v452
        %519 = vst [vmem:[%s277 + $0x78] sm:$0xff] %v454
        %520 = vst [vmem:[%s277 + $0x80] sm:$0xff] %v458
        %521 = vst [vmem:[%s277 + $0x88] sm:$0xff] %v460
        %522 = vst [vmem:[%s277 + $0x90] sm:$0xff] %v464
        %523 = vst [vmem:[%s277 + $0x98] sm:$0xff] %v466
        %524 = vst [vmem:[%s277 + $0xa0] sm:$0xff] %v470
        %525 = vst [vmem:[%s277 + $0xa8] sm:$0xff] %v472
        %526 = vst [vmem:[%s277 + $0xb0] sm:$0xff] %v476
        %527 = vst [vmem:[%s277 + $0xb8] sm:$0xff] %v478
        %528 = vst [vmem:[%s277 + $0xc0] sm:$0xff] %v482
        %529 = vst [vmem:[%s277 + $0xc8] sm:$0xff] %v484
        %530 = vst [vmem:[%s277 + $0xd0] sm:$0xff] %v488
        %531 = vst [vmem:[%s277 + $0xd8] sm:$0xff] %v490
        %532 = vst [vmem:[%s277 + $0xe0] sm:$0xff] %v494
        %533 = vst [vmem:[%s277 + $0xe8] sm:$0xff] %v496
        %534 = vst [vmem:[%s277 + $0xf0] sm:$0xff] %v500
        %535 = vst [vmem:[%s277 + $0xf8] sm:$0xff] %v502
        %s536 = sand.u32 %s123, 1
        %s537 = scalar_lea.sflag [#allocation4], %s536
        %s538 = sand.u32 %s123, 1
        %s539 = smul.addr %s538, 256
        %s540 = scalar_lea.vmem [#allocation8], %s539
        // Predicated region
        $region45: #{tpu_custom_call.1} parent=31 // pred_check
          %p541 = pneg %p133
        $region46: #{tpu_custom_call.1} parent=31 // pred_check_branch
          %543 = sbr.rel (%p541) target = $region48
        $region47: #{tpu_custom_call.1} parent=31 // pred_region
          %s544 = smul.u32 16, %s27
          %s545 = smul.u32 2, %s28
          %s547 = ssub.s32 4096, 4096
          %548 = vsyncadd %s537, %s547
          %s549 = smul.addr %s544, 4
          %s550 = sadd.s32 %s545, %s549
          %s551 = smul.addr %s550, 128
          %s552 = scalar_lea.hbm %s3, %s551
          %s553 = sshll.u32 %s540, 4
          %s554 = int_to_ptr.vmem [resolvable:$true] %s553
          %559 = dma.vmem_to_hbm [thread:$0]  %s554, 4096, %s552, %s537, 256, 512, 16
        $region48: #{tpu_custom_call.1} parent=31 // pred_fallthru
          _
      $region32: #{tpu_custom_call.1} parent=5 // pred_fallthru
        _
      %p560 = scmp.le.s32.totalorder 2, %s18
      // Predicated region
      $region49: #{tpu_custom_call.1} parent=5 // pred_check
        %p561 = pneg %p560
      $region50: #{tpu_custom_call.1} parent=5 // pred_check_branch
        %563 = sbr.rel (%p561) target = $region52
      $region51: #{tpu_custom_call.1} parent=5 // pred_region
        %s564 = ssub.s32 %s18, 2
        // Predicated region
        $region53: #{tpu_custom_call.1} parent=51 // pred_check
          %p565 = pneg %p139
        $region54: #{tpu_custom_call.1} parent=51 // pred_check_branch
          %567 = sbr.rel (%p565) target = $region56
        $region55: #{tpu_custom_call.1} parent=51 // pred_region
          %s568 = sand.u32 %s124, 1
          %s569 = scalar_lea.sflag [#allocation4], %s568
          %s570 = sand.u32 %s124, 1
          %s571 = smul.addr %s570, 256
          %s572 = scalar_lea.vmem [#allocation8], %s571
          %573 = dma.done %s569, 4096
        $region56: #{tpu_custom_call.1} parent=51 // pred_fallthru
          _
      $region52: #{tpu_custom_call.1} parent=5 // pred_fallthru
        _
    $region6: #{tpu_custom_call.1} parent=1 // loop_footer
      %s22 = sadd.s32 1, %s18
    $region7: #{tpu_custom_call.1} parent=1 // loop_footer_branch
      %17 = sbr.rel target = $region3
    $region8: #{tpu_custom_call.1} parent=1 // loop_exit
      _
    %574 = vsyncpa [#allocation3], 1
    %s575 = scalar_lea.sflag [#allocation3], 1
    %576 = vsyncpa %s575, 1
    %577 = vsyncpa [#allocation6], 1
    %s578 = scalar_lea.sflag [#allocation6], 1
    %579 = vsyncpa %s578, 1
    %580 = vsyncpa [#allocation4], 1
    %s581 = scalar_lea.sflag [#allocation4], 1
    %582 = vsyncpa %s581, 1

</llo_original>
